<compile_context>
chip_gen: v6e
topology: v6e:2x2x1
jax: 0.10.0
libtpu: 0.0.40
codegen_flags: <defaults>
</compile_context>

<pallas_src>
import numpy as np
import jax
import jax.numpy as jnp
from jax.experimental import pallas as pl
from jax.experimental.pallas import tpu as pltpu

EPSILON = 1e-05
_LANES = 128                       # vreg lane width: keep the last dim lane-dense
_BLOCK_ROWS = 8192                 # 8192 x 128 x 4B = 4 MiB per f32 block buffer
_VMEM_LIMIT = 48 * 1024 * 1024     # covers <=32 MiB footprint; < v7x 64 MiB physical
_MIN_PALLAS_ELEMS = 64 * 1024      # below this, fused XLA beats a kernel launch
_INV_LN10 = float(1.0 / np.log(10.0))


def _psnr_map_kernel(x1_ref, x2_ref, o_ref):
    """Elementwise log10(1/((x1-x2)^2+eps)) == -log((x1-x2)^2+eps)/ln(10)."""
    d = x1_ref[...].astype(jnp.float32) - x2_ref[...].astype(jnp.float32)
    o_ref[...] = (jnp.log(d * d + EPSILON) * (-_INV_LN10)).astype(o_ref.dtype)


def _make_sqdiff_partial_kernel(block_rows, valid_rows):
    """Per-block partial sums of (x1-x2)^2 folded into an (8, 128) slab.

    The (block_rows, 128) tile is reshaped to (block_rows//8, 8, 128) and
    summed over the leading axis (pure VPU vreg adds, no per-step XLU
    cross-lane reduce).  Rows of a partial trailing block (undefined VMEM
    contents) are masked to zero.  The final tiny cross-lane/sublane reduce
    happens once in the wrapper.
    """
    ragged = (valid_rows % block_rows) != 0

    def kernel(x1_ref, x2_ref, p_ref):
        d = x1_ref[...].astype(jnp.float32) - x2_ref[...].astype(jnp.float32)
        sq = d * d
        if ragged:
            row = (pl.program_id(0) * block_rows
                   + jax.lax.broadcasted_iota(jnp.int32, (block_rows, 1), 0))
            sq = jnp.where(row < valid_rows, sq, 0.0)
        p_ref[...] = jnp.sum(sq.reshape(block_rows // 8, 8, _LANES), axis=0)

    return kernel


def _psnr_elementwise_jnp(x1, x2, out_dtype):
    d = x1.astype(jnp.float32) - x2.astype(jnp.float32)
    return (jnp.log(d * d + EPSILON) * (-_INV_LN10)).astype(out_dtype)


def sim_score_psnr(batch1, batch2, reduction: bool = False, *,
                   min_pallas_elems: int = _MIN_PALLAS_ELEMS):
    """SimScore_PSNR.forward. reduction=False -> 'none' (default), True -> 'mean'."""
    x1 = jnp.asarray(batch1)
    x2 = jnp.asarray(batch2)
    assert x1.shape == x2.shape
    orig_shape = x1.shape
    out_dtype = x1.dtype if jnp.issubdtype(x1.dtype, jnp.floating) else jnp.float32
    total = int(np.prod(orig_shape)) if orig_shape else 1

    # Block rows stay a multiple of the dtype's sublane packing so every tile
    # is (8,128)-legal in its native dtype (8 rows/f32 vreg, 16/bf16, 32/int8).
    itemsize = jnp.dtype(x1.dtype).itemsize
    row_align = max(8, 32 // max(1, itemsize))
    chunk = row_align * _LANES
    rows_a = (total // chunk) * row_align       # lane-aligned prefix, in rows
    aligned = rows_a * _LANES

    # Small-input fast path: launch + reshape overhead dominates tiny inputs.
    if total < min_pallas_elems or rows_a == 0:
        sq = (x1.astype(jnp.float32) - x2.astype(jnp.float32)) ** 2
        if reduction:
            return jnp.log10(1.0 / (jnp.mean(sq) + EPSILON))
        return (jnp.log(sq + EPSILON) * (-_INV_LN10)).astype(out_dtype)

    # Lane-dense views of the aligned prefix (zero-copy reshape when the total
    # element count is already chunk-aligned, which holds for typical NCHW).
    x1f = x1.reshape(-1)
    x2f = x2.reshape(-1)
    x1v = x1f[:aligned].reshape(rows_a, _LANES)
    x2v = x2f[:aligned].reshape(rows_a, _LANES)

    br = rows_a if rows_a <= _BLOCK_ROWS else _BLOCK_ROWS
    grid = (pl.cdiv(rows_a, br),)
    in_specs = [
        pl.BlockSpec((br, _LANES), lambda i: (i, 0)),
        pl.BlockSpec((br, _LANES), lambda i: (i, 0)),
    ]
    cparams = pltpu.CompilerParams(
        dimension_semantics=("parallel",),      # independent tiles on both paths
        vmem_limit_bytes=_VMEM_LIMIT,
    )

    if not reduction:
        # reduction='none': pure HBM-streaming elementwise map.
        main = pl.pallas_call(
            _psnr_map_kernel,
            out_shape=jax.ShapeDtypeStruct((rows_a, _LANES), out_dtype),
            grid_spec=pltpu.PrefetchScalarGridSpec(
                num_scalar_prefetch=0,
                grid=grid,
                in_specs=in_specs,
                out_specs=pl.BlockSpec((br, _LANES), lambda i: (i, 0)),
            ),
            compiler_params=cparams,
        )(x1v, x2v)
        flat = main.reshape(-1)
        if aligned < total:   # ragged (<chunk-element) tail handled with jnp
            tail = _psnr_elementwise_jnp(x1f[aligned:], x2f[aligned:], out_dtype)
            flat = jnp.concatenate([flat, tail])
        return flat.reshape(orig_shape)

    # reduction='mean': parallel per-block partial sums; finalize in wrapper.
    num_blocks = grid[0]
    partials = pl.pallas_call(
        _make_sqdiff_partial_kernel(br, rows_a),
        out_shape=jax.ShapeDtypeStruct((num_blocks * 8, _LANES), jnp.float32),
        grid_spec=pltpu.PrefetchScalarGridSpec(
            num_scalar_prefetch=0,
            grid=grid,
            in_specs=in_specs,
            out_specs=pl.BlockSpec((8, _LANES), lambda i: (i, 0)),
        ),
        compiler_params=cparams,
    )(x1v, x2v)
    total_sq = jnp.sum(partials)                # tiny (num_blocks*8, 128) reduce
    if aligned < total:
        dt = x1f[aligned:].astype(jnp.float32) - x2f[aligned:].astype(jnp.float32)
        total_sq = total_sq + jnp.sum(dt * dt)
    mse = total_sq / total
    return jnp.log10(1.0 / (mse + EPSILON))


if __name__ == "__main__":
    key = jax.random.PRNGKey(0)
    k1, k2, k3, k4 = jax.random.split(key, 4)

    def ref_map(a, b):
        return jnp.log10(1.0 / ((a - b) ** 2 + EPSILON))

    def ref_mean(a, b):
        return jnp.log10(1.0 / (jnp.mean((a - b) ** 2) + EPSILON))

    # 1) Module demo shape (N,C,H,W)=(2,4,16,16).  min_pallas_elems=0 forces
    #    the Pallas path so the kernel itself is exercised at demo scale.
    b1 = jax.random.uniform(k1, (2, 4, 16, 16), dtype=jnp.float32)
    b2 = jax.random.uniform(k2, (2, 4, 16, 16), dtype=jnp.float32)

    out_map = sim_score_psnr(b1, b2, reduction=False, min_pallas_elems=0)
    jax.block_until_ready(out_map)
    np.testing.assert_allclose(np.asarray(out_map), np.asarray(ref_map(b1, b2)),
                               rtol=1e-5, atol=1e-5)

    out_mean = sim_score_psnr(b1, b2, reduction=True, min_pallas_elems=0)
    jax.block_until_ready(out_mean)
    np.testing.assert_allclose(np.asarray(out_mean), np.asarray(ref_mean(b1, b2)),
                               rtol=1e-4, atol=1e-4)

    # 2) Larger shape exercising a multi-block grid, a partial trailing block
    #    (masked in the reduction kernel) and a non-multiple-of-128 tail.
    c1 = jax.random.uniform(k3, (4, 3, 320, 321), dtype=jnp.float32)
    c2 = jax.random.uniform(k4, (4, 3, 320, 321), dtype=jnp.float32)

    out_map2 = sim_score_psnr(c1, c2, reduction=False)
    jax.block_until_ready(out_map2)
    np.testing.assert_allclose(np.asarray(out_map2), np.asarray(ref_map(c1, c2)),
                               rtol=1e-5, atol=1e-5)

    out_mean2 = sim_score_psnr(c1, c2, reduction=True)
    jax.block_until_ready(out_mean2)
    np.testing.assert_allclose(np.asarray(out_mean2), np.asarray(ref_mean(c1, c2)),
                               rtol=1e-4, atol=1e-4)

    print("KERNEL_OK")
</pallas_src>

<mosaic_0001>
module attributes {stable_mosaic.version = 11 : i64} {
  func.func @_psnr_map_kernel(%arg0: i32, %arg1: memref<16x128xf32, #tpu.memory_space<vmem>>, %arg2: memref<16x128xf32, #tpu.memory_space<vmem>>, %arg3: memref<16x128xf32, #tpu.memory_space<vmem>>) attributes {dimension_semantics = [#tpu.dimension_semantics<parallel>], iteration_bounds = array<i64: 1>, scalar_prefetch = 0 : i64, scratch_operands = 0 : i64, tpu.core_type = #tpu.core_type<tc>, window_params = [{transform_indices = @transform_0, window_bounds = array<i64: 16, 128>}, {transform_indices = @transform_1, window_bounds = array<i64: 16, 128>}, {transform_indices = @transform_2, window_bounds = array<i64: 16, 128>}]} {
    %c0 = arith.constant 0 : index
    %c0_0 = arith.constant 0 : index
    %0 = vector.load %arg1[%c0, %c0_0] : memref<16x128xf32, #tpu.memory_space<vmem>>, vector<16x128xf32>
    %c0_1 = arith.constant 0 : index
    %c0_2 = arith.constant 0 : index
    %1 = vector.load %arg2[%c0_1, %c0_2] : memref<16x128xf32, #tpu.memory_space<vmem>>, vector<16x128xf32>
    %2 = arith.subf %0, %1 : vector<16x128xf32>
    %3 = arith.mulf %2, %2 : vector<16x128xf32>
    %cst = arith.constant 9.99999974E-6 : f32
    %4 = vector.broadcast %cst : f32 to vector<16x128xf32>
    %5 = arith.addf %3, %4 : vector<16x128xf32>
    %6 = math.log %5 : vector<16x128xf32>
    %cst_3 = arith.constant -0.434294492 : f32
    %7 = vector.broadcast %cst_3 : f32 to vector<16x128xf32>
    %8 = arith.mulf %6, %7 : vector<16x128xf32>
    %c0_4 = arith.constant 0 : index
    %c0_5 = arith.constant 0 : index
    %9 = vector.load %arg3[%c0_4, %c0_5] : memref<16x128xf32, #tpu.memory_space<vmem>>, vector<16x128xf32>
    tpu.vector_store %arg3[%c0_4, %c0_5], %8 {strides = array<i32>} : memref<16x128xf32, #tpu.memory_space<vmem>>, vector<16x128xf32>,
    return
  }
  func.func @transform_0(%arg0: i32) -> (i32, i32) {
    %c0_i32 = arith.constant 0 : i32
    %c0_i32_0 = arith.constant 0 : i32
    return %arg0, %c0_i32 : i32, i32
  }
  func.func @transform_1(%arg0: i32) -> (i32, i32) {
    %c0_i32 = arith.constant 0 : i32
    %c0_i32_0 = arith.constant 0 : i32
    return %arg0, %c0_i32 : i32, i32
  }
  func.func @transform_2(%arg0: i32) -> (i32, i32) {
    %c0_i32 = arith.constant 0 : i32
    %c0_i32_0 = arith.constant 0 : i32
    return %arg0, %c0_i32 : i32, i32
  }
}

</mosaic_0001>

<llo_original>
// kernel: tpu_custom_call.1
$region0: #{tpu_custom_call.1}
  #allocation0 [shape = 'u32[]', space=smem, size = 0x4, offset = 0x4, fixed_abs, tag = 'smem constant byte address 0x4 - core index']
  #allocation1 [shape = 'u32[144,128]{1,0:T(1,128)}', space=vmem, size = 0x12000, scoped, tag = 'internal scratch']
  %s0 = inlined_call_operand.hbm [shape: f32[16,128], index: 0, kind: input, shape index: {}]
  %s1 = inlined_call_operand.hbm [shape: f32[16,128], index: 1, kind: input, shape index: {}]
  %s2 = inlined_call_operand.hbm [shape: f32[16,128], index: 2, kind: output, shape index: {}]
  %s3 = sld [smem:[#allocation0]]
  $region26: #{tpu_custom_call.1} parent=0
    _
  %s5 = ssub.s32 1, %s3
  %s6 = scalar_select 0, %s5, %s3
  $region1: #{tpu_custom_call.1} parent=0
    #allocation2 [shape = 'u8[8192]{0}', space=vmem, size = 0x2000, scoped, tag = 'input window, operand 0, single buffered']
    #allocation3 [shape = 's32[1]{0}', space=sflag, size = 0x4, scoped, tag = 'scoped memory for tpu_custom_call.1']
    #allocation4 [shape = 's32[1]{0}', space=sflag, size = 0x4, scoped, tag = 'scoped memory for tpu_custom_call.1']
    #allocation5 [shape = 'u8[8192]{0}', space=vmem, size = 0x2000, scoped, tag = 'input window, operand 1, single buffered']
    #allocation6 [shape = 's32[1]{0}', space=sflag, size = 0x4, scoped, tag = 'scoped memory for tpu_custom_call.1']
    #allocation7 [shape = 'u8[8192]{0}', space=vmem, size = 0x2000, scoped, tag = 'output window, operand 0, single buffered']
    %7 = vsyncpa [#allocation3], 0
    %8 = vsyncpa [#allocation6], 0
    %9 = vsyncpa [#allocation4], 0
    // Predicated region
    $region2: #{tpu_custom_call.1} parent=1 // pred_check
      _
    $region3: #{tpu_custom_call.1} parent=1 // pred_check_branch
      %11 = sbr.rel (0) target = $region5
    $region4: #{tpu_custom_call.1} parent=1 // pred_region
      %s13 = ssub.s32 256, 256
      %14 = vsyncadd [#allocation3], %s13
      %s15 = sshll.u32 [#allocation2], 4
      %s16 = int_to_ptr.vmem [resolvable:$true] %s15
      %21 = dma.hbm_to_vmem [thread:$0]  %s0, 256, %s16, [#allocation3], 128, 128, 8
    $region5: #{tpu_custom_call.1} parent=1 // pred_fallthru
      _
    // Predicated region
    $region6: #{tpu_custom_call.1} parent=1 // pred_check
      _
    $region7: #{tpu_custom_call.1} parent=1 // pred_check_branch
      %23 = sbr.rel (0) target = $region9
    $region8: #{tpu_custom_call.1} parent=1 // pred_region
      %s25 = ssub.s32 256, 256
      %26 = vsyncadd [#allocation6], %s25
      %s27 = sshll.u32 [#allocation5], 4
      %s28 = int_to_ptr.vmem [resolvable:$true] %s27
      %33 = dma.hbm_to_vmem [thread:$0]  %s1, 256, %s28, [#allocation6], 128, 128, 8
    $region9: #{tpu_custom_call.1} parent=1 // pred_fallthru
      _
    // Predicated region
    $region10: #{tpu_custom_call.1} parent=1 // pred_check
      _
    $region11: #{tpu_custom_call.1} parent=1 // pred_check_branch
      %35 = sbr.rel (0) target = $region13
    $region12: #{tpu_custom_call.1} parent=1 // pred_region
      %36 = dma.done [#allocation3], 256
    $region13: #{tpu_custom_call.1} parent=1 // pred_fallthru
      _
    // Predicated region
    $region14: #{tpu_custom_call.1} parent=1 // pred_check
      _
    $region15: #{tpu_custom_call.1} parent=1 // pred_check_branch
      %38 = sbr.rel (0) target = $region17
    $region16: #{tpu_custom_call.1} parent=1 // pred_region
      %39 = dma.done [#allocation6], 256
    $region17: #{tpu_custom_call.1} parent=1 // pred_fallthru
      _
    %v40 = vld [vmem:[#allocation2] sm:$0xff]
    %v41 = vld [vmem:[#allocation2 + $0x8] sm:$0xff]
    %v42 = vld [vmem:[#allocation5] sm:$0xff]
    %v43 = vld [vmem:[#allocation5 + $0x8] sm:$0xff]
    %v44 = vsub.f32 %v40, %v42
    %v45 = vsub.f32 %v41, %v43
    %v46 = vmul.f32 %v44, %v44
    %v47 = vmul.f32 %v45, %v45
    %v48 = vadd.f32 %v46, 1e-05
    %v49 = vadd.f32 %v47, 1e-05
    %v50 = vlog2.pop %v48
    %v51 = vmul.f32 %v50, 0.6931472
    %v52 = vlog2.pop %v49
    %v53 = vmul.f32 %v52, 0.6931472
    %v54 = vmul.f32 %v51, -0.4342945
    %v55 = vmul.f32 %v53, -0.4342945
    %56 = vst [vmem:[#allocation7] sm:$0xff] %v54
    %57 = vst [vmem:[#allocation7 + $0x8] sm:$0xff] %v55
    // Predicated region
    $region18: #{tpu_custom_call.1} parent=1 // pred_check
      _
    $region19: #{tpu_custom_call.1} parent=1 // pred_check_branch
      %59 = sbr.rel (0) target = $region21
    $region20: #{tpu_custom_call.1} parent=1 // pred_region
      %s61 = ssub.s32 256, 256
      %62 = vsyncadd [#allocation4], %s61
      %s63 = sshll.u32 [#allocation7], 4
      %s64 = int_to_ptr.vmem [resolvable:$true] %s63
      %69 = dma.vmem_to_hbm [thread:$0]  %s64, 256, %s2, [#allocation4], 128, 128, 8
    $region21: #{tpu_custom_call.1} parent=1 // pred_fallthru
      _
    // Predicated region
    $region22: #{tpu_custom_call.1} parent=1 // pred_check
      _
    $region23: #{tpu_custom_call.1} parent=1 // pred_check_branch
      %71 = sbr.rel (0) target = $region25
    $region24: #{tpu_custom_call.1} parent=1 // pred_region
      %72 = dma.done [#allocation4], 256
    $region25: #{tpu_custom_call.1} parent=1 // pred_fallthru
      _
    %73 = vsyncpa [#allocation3], 1
    %74 = vsyncpa [#allocation6], 1
    %75 = vsyncpa [#allocation4], 1

</llo_original>
